<compile_context>
chip_gen: v5e
topology: v5e:2x2
jax: 0.10.0
libtpu: 0.0.40
codegen_flags: <defaults>
</compile_context>

<pallas_src>
from functools import partial

import jax
import jax.numpy as jnp
from jax import lax
from jax.experimental import pallas as pl
from jax.experimental.pallas import tpu as pltpu


# --------------------------- Stage 1: block mask ----------------------------

def _blockmask_kernel(u_ref, bm_ref, sum_ref, *, gamma, block_size, H, W):
    """One batch per grid step.
    u_ref:   (1, 1, H*W) uniform noise (f32), lane-dense.
    bm_ref:  (1, 1, H*W) UNSCALED block mask, x.dtype.
    sum_ref: (B,) f32 in SMEM — per-batch partial sums of the block mask."""
    k = block_size
    p = k // 2
    L = H * W
    b = pl.program_id(0)

    m = jnp.where(u_ref[...] < gamma, 1.0, 0.0).astype(jnp.float32)   # seed mask

    lane = lax.broadcasted_iota(jnp.int32, (1, 1, L), 2)
    col = lane % W                                                    # x coordinate

    # Separable stride-1 max pool (rows, then cols): O(2k) maxes vs O(k^2).
    # Shifts are circular lane rolls (XLU) on the flattened layout; iota masks
    # zero the halo. A zero halo equals max_pool2d's -inf padding here because
    # the seed mask is non-negative and every valid window contains >=1 pixel.
    rows = m
    for dy in range(k):
        s = dy - p                                   # row offset y+s
        if s == 0:
            continue
        shifted = pltpu.roll(m, shift=(-s * W) % L, axis=2)
        valid = (lane + s * W >= 0) & (lane + s * W < L)
        rows = jnp.maximum(rows, jnp.where(valid, shifted, 0.0))

    pooled = rows
    for dx in range(k):
        s = dx - p                                   # column offset x+s
        if s == 0:
            continue
        shifted = pltpu.roll(rows, shift=(-s) % L, axis=2)
        valid = (col + s >= 0) & (col + s < W)       # also kills row-boundary wrap
        pooled = jnp.maximum(pooled, jnp.where(valid, shifted, 0.0))

    bm = 1.0 - pooled                                # unscaled block mask, {0, 1}
    sum_ref[b] = jnp.sum(bm)                         # per-batch partial sum -> SMEM
    bm_ref[...] = bm.astype(bm_ref.dtype)


def dropblock_mask(u, drop_rate, block_size, out_dtype):
    """u: (B, H, W) uniform[0,1) noise.
    Returns (block_mask (B, 1, H*W) in out_dtype, per-batch sums (B,) f32)."""
    B, H, W = u.shape
    L = H * W
    gamma = drop_rate / (block_size ** 2)
    u3 = u.astype(jnp.float32).reshape(B, 1, L)      # free, lane-dense reshape

    return pl.pallas_call(
        partial(_blockmask_kernel, gamma=gamma, block_size=block_size, H=H, W=W),
        out_shape=(jax.ShapeDtypeStruct((B, 1, L), out_dtype),
                   jax.ShapeDtypeStruct((B,), jnp.float32)),
        grid=(B,),
        in_specs=[pl.BlockSpec((1, 1, L), lambda b: (b, 0, 0))],
        out_specs=(pl.BlockSpec((1, 1, L), lambda b: (b, 0, 0)),
                   pl.BlockSpec(memory_space=pltpu.MemorySpace.SMEM)),
        # The partial-sum output is an untiled SMEM vector written across grid
        # steps, so keep this (tiny) grid sequential; megacore sharding belongs
        # to the much heavier stage-2 apply kernel.
        compiler_params=pltpu.CompilerParams(
            dimension_semantics=("arbitrary",)),
    )(u3)


# ----------------------- Stage 2: apply mask to x ----------------------------

def _apply_kernel(scale_ref, x_ref, m_ref, o_ref):
    # (TB, TC, TL) * (TB, 1, TL) sublane-broadcast; global rescale from SMEM
    # scalar (free — this kernel is HBM-bound with huge VPU slack).
    s = scale_ref[0]
    o_ref[...] = (x_ref[...] * m_ref[...] * s).astype(o_ref.dtype)


def _choose_apply_tiles(B, C, L, itemsize):
    # Lane tile: full L or a 128-multiple chunk; sublane tile: full C or 256.
    TL = L if L <= 4096 else 4096
    TC = C if C <= 256 else 256
    # Batch tile: target ~2 MiB x-blocks so double-buffered x-in + x-out stays
    # around 8 MiB — under v5e's 16 MiB scoped-VMEM default and v6e/v7x budgets,
    # while keeping each grid step moving megabytes rather than kilobytes.
    target = 2 << 20
    TB = max(1, min(B, target // max(1, TC * TL * itemsize)))

    def n_steps(tb, tc, tl):
        return -(-B // tb) * -(-C // tc) * -(-L // tl)

    # Guarantee >=2 grid steps when possible so both v7x TensorCores get work.
    if n_steps(TB, TC, TL) == 1:
        if B > 1:
            TB = (B + 1) // 2
        elif L >= 256 and L % 256 == 0:
            TL = L // 2
        elif C >= 16 and C % 16 == 0:
            TC = C // 2
    return TB, TC, TL


def dropblock_apply(x, bm, scale):
    """x: (B, C, H, W); bm: (B, 1, H*W) unscaled mask (x.dtype); scale: (1,) f32."""
    B, C, H, W = x.shape
    L = H * W
    x2 = x.reshape(B, C, L)                          # free flatten, no transpose
    TB, TC, TL = _choose_apply_tiles(B, C, L, x.dtype.itemsize)

    out = pl.pallas_call(
        _apply_kernel,
        out_shape=jax.ShapeDtypeStruct((B, C, L), x.dtype),
        # Channel axis innermost: the mask block index (b, 0, l) is constant
        # across it, so the repeated mask DMA per channel tile is elided.
        grid=(pl.cdiv(B, TB), pl.cdiv(L, TL), pl.cdiv(C, TC)),
        in_specs=[
            pl.BlockSpec(memory_space=pltpu.MemorySpace.SMEM),        # scale
            pl.BlockSpec((TB, TC, TL), lambda b, l, c: (b, c, l)),    # x
            pl.BlockSpec((TB, 1, TL), lambda b, l, c: (b, 0, l)),     # mask
        ],
        out_specs=pl.BlockSpec((TB, TC, TL), lambda b, l, c: (b, c, l)),
        compiler_params=pltpu.CompilerParams(
            dimension_semantics=("parallel", "parallel", "parallel")),
    )(scale, x2, bm)
    return out.reshape(B, C, H, W)


# ------------------------------ module forward -------------------------------

def drop_forward(x, u, *, drop_rate=0.1, block_size=2, training=True):
    """DropBlock forward. x: (B, C, H, W); u: (B, H, W) uniform[0,1) noise
    (the torch.rand draw is generated outside the kernel; thresholding, pooling,
    rescale and apply run in Pallas)."""
    if not training or drop_rate == 0:
        return x
    B, C, H, W = x.shape
    bm, partial_sums = dropblock_mask(u, drop_rate, block_size, x.dtype)
    numel = float(B * H * W)
    # Global rescale computed in plain JAX from the per-batch partial sums;
    # jnp.maximum guards the (vanishingly rare) all-dropped divide-by-zero.
    scale = (numel / jnp.maximum(jnp.sum(partial_sums), 1.0)).astype(jnp.float32)
    return dropblock_apply(x, bm, scale.reshape(1))


# pure-JAX reference for a correctness check
def drop_forward_ref(x, u, *, drop_rate=0.1, block_size=2):
    gamma = drop_rate / block_size ** 2
    mask = (u < gamma).astype(jnp.float32)                       # (B, H, W)
    pad = block_size // 2
    pooled = lax.reduce_window(mask[:, None], -jnp.inf, lax.max,
                               (1, 1, block_size, block_size), (1, 1, 1, 1),
                               [(0, 0), (0, 0), (pad, pad), (pad, pad)])
    if block_size % 2 == 0:
        pooled = pooled[:, :, :-1, :-1]
    bm = 1.0 - pooled[:, 0]
    out = x * bm[:, None]
    return out * bm.size / jnp.sum(bm)


if __name__ == "__main__":
    key = jax.random.PRNGKey(0)
    kx, ku = jax.random.split(key)
    B, C, H, W = 2, 4, 16, 16
    drop_rate, block_size = 0.1, 2

    x = jax.random.normal(kx, (B, C, H, W), dtype=jnp.float32)
    u = jax.random.uniform(ku, (B, H, W), dtype=jnp.float32)

    fwd = jax.jit(partial(drop_forward, drop_rate=drop_rate,
                          block_size=block_size, training=True))
    out = jax.block_until_ready(fwd(x, u))
    assert out.shape == (B, C, H, W) and out.dtype == jnp.float32

    ref = drop_forward_ref(x, u, drop_rate=drop_rate, block_size=block_size)
    assert jnp.allclose(out, ref, atol=1e-4, rtol=1e-4), \
        float(jnp.max(jnp.abs(out - ref)))

    # eval-mode path is identity
    out_eval = drop_forward(x, u, drop_rate=drop_rate,
                            block_size=block_size, training=False)
    assert jnp.array_equal(out_eval, x)

    print("KERNEL_OK")
</pallas_src>

<mosaic_0001>
module attributes {stable_mosaic.version = 11 : i64} {
  func.func @_blockmask_kernel(%arg0: i32, %arg1: memref<1x1x256xf32, #tpu.memory_space<vmem>>, %arg2: memref<1x1x256xf32, #tpu.memory_space<vmem>>, %arg3: memref<2xf32, #tpu.memory_space<smem>>) attributes {dimension_semantics = [#tpu.dimension_semantics<arbitrary>], iteration_bounds = array<i64: 2>, scalar_prefetch = 0 : i64, scratch_operands = 0 : i64, tpu.core_type = #tpu.core_type<tc>, window_params = [{transform_indices = @transform_0, window_bounds = array<i64: 1, 1, 256>}, {transform_indices = @transform_1, window_bounds = array<i64: 1, 1, 256>}, {transform_indices = @transform_2, window_bounds = array<i64: 2>}]} {
    %c0 = arith.constant 0 : index
    %c0_0 = arith.constant 0 : index
    %c0_1 = arith.constant 0 : index
    %0 = vector.load %arg1[%c0, %c0_0, %c0_1] : memref<1x1x256xf32, #tpu.memory_space<vmem>>, vector<1x1x256xf32>
    %cst = arith.constant 2.500000e-02 : f32
    %1 = vector.broadcast %cst : f32 to vector<1x1x256xf32>
    %2 = arith.cmpf olt, %0, %1 : vector<1x1x256xf32>
    %cst_2 = arith.constant 1.000000e+00 : f32
    %cst_3 = arith.constant 0.000000e+00 : f32
    %3 = vector.broadcast %cst_2 : f32 to vector<1x1x256xf32>
    %4 = vector.broadcast %cst_3 : f32 to vector<1x1x256xf32>
    %5 = arith.select %2, %3, %4 : vector<1x1x256xi1>, vector<1x1x256xf32>
    %6 = tpu.iota {dimensions = array<i32: 2>} : vector<1x1x256xi32>
    %c16_i32 = arith.constant 16 : i32
    %c0_i32 = arith.constant 0 : i32
    %7 = arith.cmpi eq, %c16_i32, %c0_i32 : i32
    %c1_i32 = arith.constant 1 : i32
    %8 = arith.select %7, %c1_i32, %c16_i32 : i32
    %9 = vector.broadcast %8 : i32 to vector<1x1x256xi32>
    %10 = arith.remsi %6, %9 : vector<1x1x256xi32>
    %c0_i32_4 = arith.constant 0 : i32
    %11 = vector.broadcast %c0_i32_4 : i32 to vector<1x1x256xi32>
    %12 = arith.cmpi ne, %10, %11 : vector<1x1x256xi32>
    %c0_i32_5 = arith.constant 0 : i32
    %13 = vector.broadcast %c0_i32_5 : i32 to vector<1x1x256xi32>
    %14 = arith.cmpi slt, %10, %13 : vector<1x1x256xi32>
    %c0_i32_6 = arith.constant 0 : i32
    %15 = arith.cmpi slt, %8, %c0_i32_6 : i32
    %16 = vector.broadcast %15 : i1 to vector<1x1x256xi1>
    %17 = vector.broadcast %16 : vector<1x1x256xi1> to vector<1x1x256xi1>
    %18 = arith.xori %14, %17 : vector<1x1x256xi1>
    %19 = arith.andi %18, %12 : vector<1x1x256xi1>
    %20 = vector.broadcast %8 : i32 to vector<1x1x256xi32>
    %21 = arith.addi %10, %20 : vector<1x1x256xi32>
    %22 = arith.select %19, %21, %10 : vector<1x1x256xi1>, vector<1x1x256xi32>
    %c16_i32_7 = arith.constant 16 : i32
    %23 = tpu.dynamic_rotate %5 by %c16_i32_7 dim 2 : vector<1x1x256xf32>, i32 -> vector<1x1x256xf32>
    %c-16_i32 = arith.constant -16 : i32
    %24 = vector.broadcast %c-16_i32 : i32 to vector<1x1x256xi32>
    %25 = arith.addi %6, %24 : vector<1x1x256xi32>
    %c0_i32_8 = arith.constant 0 : i32
    %26 = vector.broadcast %c0_i32_8 : i32 to vector<1x1x256xi32>
    %27 = arith.cmpi sge, %25, %26 : vector<1x1x256xi32>
    %c-16_i32_9 = arith.constant -16 : i32
    %28 = vector.broadcast %c-16_i32_9 : i32 to vector<1x1x256xi32>
    %29 = arith.addi %6, %28 : vector<1x1x256xi32>
    %c256_i32 = arith.constant 256 : i32
    %30 = vector.broadcast %c256_i32 : i32 to vector<1x1x256xi32>
    %31 = arith.cmpi slt, %29, %30 : vector<1x1x256xi32>
    %32 = arith.andi %27, %31 : vector<1x1x256xi1>
    %cst_10 = arith.constant 0.000000e+00 : f32
    %33 = vector.broadcast %cst_10 : f32 to vector<1x1x256xf32>
    %34 = arith.select %32, %23, %33 : vector<1x1x256xi1>, vector<1x1x256xf32>
    %35 = arith.maximumf %5, %34 : vector<1x1x256xf32>
    %c1_i32_11 = arith.constant 1 : i32
    %36 = tpu.dynamic_rotate %35 by %c1_i32_11 dim 2 : vector<1x1x256xf32>, i32 -> vector<1x1x256xf32>
    %c-1_i32 = arith.constant -1 : i32
    %37 = vector.broadcast %c-1_i32 : i32 to vector<1x1x256xi32>
    %38 = arith.addi %22, %37 : vector<1x1x256xi32>
    %c0_i32_12 = arith.constant 0 : i32
    %39 = vector.broadcast %c0_i32_12 : i32 to vector<1x1x256xi32>
    %40 = arith.cmpi sge, %38, %39 : vector<1x1x256xi32>
    %c-1_i32_13 = arith.constant -1 : i32
    %41 = vector.broadcast %c-1_i32_13 : i32 to vector<1x1x256xi32>
    %42 = arith.addi %22, %41 : vector<1x1x256xi32>
    %c16_i32_14 = arith.constant 16 : i32
    %43 = vector.broadcast %c16_i32_14 : i32 to vector<1x1x256xi32>
    %44 = arith.cmpi slt, %42, %43 : vector<1x1x256xi32>
    %45 = arith.andi %40, %44 : vector<1x1x256xi1>
    %cst_15 = arith.constant 0.000000e+00 : f32
    %46 = vector.broadcast %cst_15 : f32 to vector<1x1x256xf32>
    %47 = arith.select %45, %36, %46 : vector<1x1x256xi1>, vector<1x1x256xf32>
    %48 = arith.maximumf %35, %47 : vector<1x1x256xf32>
    %cst_16 = arith.constant 1.000000e+00 : f32
    %49 = vector.broadcast %cst_16 : f32 to vector<1x1x256xf32>
    %50 = arith.subf %49, %48 : vector<1x1x256xf32>
    %51 = vector.shape_cast %50 : vector<1x1x256xf32> to vector<1x1x1x256xf32>
    %cst_17 = arith.constant dense<0.000000e+00> : vector<1xf32>
    %52 = vector.multi_reduction <add>, %51, %cst_17 [1, 2, 3] : vector<1x1x1x256xf32> to vector<1xf32>
    %53 = vector.shape_cast %52 : vector<1xf32> to vector<1x1x1x1xf32>
    %54 = vector.extract %53[0, 0, 0, 0] : f32 from vector<1x1x1x1xf32>
    %55 = arith.index_cast %arg0 : i32 to index
    %56 = memref.load %arg3[%55] : memref<2xf32, #tpu.memory_space<smem>>
    memref.store %54, %arg3[%55] : memref<2xf32, #tpu.memory_space<smem>>
    %c0_18 = arith.constant 0 : index
    %c0_19 = arith.constant 0 : index
    %c0_20 = arith.constant 0 : index
    %57 = vector.load %arg2[%c0_18, %c0_19, %c0_20] : memref<1x1x256xf32, #tpu.memory_space<vmem>>, vector<1x1x256xf32>
    tpu.vector_store %arg2[%c0_18, %c0_19, %c0_20], %50 {strides = array<i32>} : memref<1x1x256xf32, #tpu.memory_space<vmem>>, vector<1x1x256xf32>,
    return
  }
  func.func @transform_0(%arg0: i32) -> (i32, i32, i32) {
    %c0_i32 = arith.constant 0 : i32
    %c0_i32_0 = arith.constant 0 : i32
    %c0_i32_1 = arith.constant 0 : i32
    return %arg0, %c0_i32, %c0_i32_0 : i32, i32, i32
  }
  func.func @transform_1(%arg0: i32) -> (i32, i32, i32) {
    %c0_i32 = arith.constant 0 : i32
    %c0_i32_0 = arith.constant 0 : i32
    %c0_i32_1 = arith.constant 0 : i32
    return %arg0, %c0_i32, %c0_i32_0 : i32, i32, i32
  }
  func.func @transform_2(%arg0: i32) -> i32 {
    %c0_i32 = arith.constant 0 : i32
    %c0_i32_0 = arith.constant 0 : i32
    return %c0_i32 : i32
  }
}

module attributes {stable_mosaic.version = 11 : i64} {
  func.func @_apply_kernel(%arg0: i32, %arg1: i32, %arg2: i32, %arg3: memref<1xf32, #tpu.memory_space<smem>>, %arg4: memref<1x4x256xf32, #tpu.memory_space<vmem>>, %arg5: memref<1x1x256xf32, #tpu.memory_space<vmem>>, %arg6: memref<1x4x256xf32, #tpu.memory_space<vmem>>) attributes {dimension_semantics = [#tpu.dimension_semantics<parallel>, #tpu.dimension_semantics<parallel>, #tpu.dimension_semantics<parallel>], iteration_bounds = array<i64: 2, 1, 1>, scalar_prefetch = 0 : i64, scratch_operands = 0 : i64, tpu.core_type = #tpu.core_type<tc>, window_params = [{transform_indices = @transform_0, window_bounds = array<i64: 1>}, {transform_indices = @transform_1, window_bounds = array<i64: 1, 4, 256>}, {transform_indices = @transform_2, window_bounds = array<i64: 1, 1, 256>}, {transform_indices = @transform_3, window_bounds = array<i64: 1, 4, 256>}]} {
    %c0 = arith.constant 0 : index
    %0 = memref.load %arg3[%c0] : memref<1xf32, #tpu.memory_space<smem>>
    %c0_0 = arith.constant 0 : index
    %c0_1 = arith.constant 0 : index
    %c0_2 = arith.constant 0 : index
    %1 = vector.load %arg4[%c0_0, %c0_1, %c0_2] : memref<1x4x256xf32, #tpu.memory_space<vmem>>, vector<1x4x256xf32>
    %c0_3 = arith.constant 0 : index
    %c0_4 = arith.constant 0 : index
    %c0_5 = arith.constant 0 : index
    %2 = vector.load %arg5[%c0_3, %c0_4, %c0_5] : memref<1x1x256xf32, #tpu.memory_space<vmem>>, vector<1x1x256xf32>
    %3 = vector.broadcast %2 : vector<1x1x256xf32> to vector<1x4x256xf32>
    %4 = arith.mulf %1, %3 : vector<1x4x256xf32>
    %5 = vector.broadcast %0 : f32 to vector<1x4x256xf32>
    %6 = arith.mulf %4, %5 : vector<1x4x256xf32>
    %c0_6 = arith.constant 0 : index
    %c0_7 = arith.constant 0 : index
    %c0_8 = arith.constant 0 : index
    %7 = vector.load %arg6[%c0_6, %c0_7, %c0_8] : memref<1x4x256xf32, #tpu.memory_space<vmem>>, vector<1x4x256xf32>
    tpu.vector_store %arg6[%c0_6, %c0_7, %c0_8], %6 {strides = array<i32>} : memref<1x4x256xf32, #tpu.memory_space<vmem>>, vector<1x4x256xf32>,
    return
  }
  func.func @transform_0(%arg0: i32, %arg1: i32, %arg2: i32) -> i32 {
    %c0_i32 = arith.constant 0 : i32
    %c0_i32_0 = arith.constant 0 : i32
    return %c0_i32 : i32
  }
  func.func @transform_1(%arg0: i32, %arg1: i32, %arg2: i32) -> (i32, i32, i32) {
    %c0_i32 = arith.constant 0 : i32
    return %arg0, %arg2, %arg1 : i32, i32, i32
  }
  func.func @transform_2(%arg0: i32, %arg1: i32, %arg2: i32) -> (i32, i32, i32) {
    %c0_i32 = arith.constant 0 : i32
    %c0_i32_0 = arith.constant 0 : i32
    return %arg0, %c0_i32, %arg1 : i32, i32, i32
  }
  func.func @transform_3(%arg0: i32, %arg1: i32, %arg2: i32) -> (i32, i32, i32) {
    %c0_i32 = arith.constant 0 : i32
    return %arg0, %arg2, %arg1 : i32, i32, i32
  }
}

</mosaic_0001>

<llo_original>
// kernel: drop_forward.3
$region0: #{drop_forward.3}
  #allocation0 [shape = 'u32[]', space=smem, size = 0x4, offset = 0x4, fixed_abs, tag = 'smem constant byte address 0x4 - core index']
  #allocation1 [shape = 'u32[72,128]{1,0:T(1,128)}', space=vmem, size = 0x9000, scoped, tag = 'internal scratch']
  #allocation2 [shape = 'f32[1]{0:T(128)S(6)}', space=smem, size = 0x200, scoped, tag = 'scoped memory for drop_forward.3']
  %s0 = inlined_call_operand.<no memory space> [shape: f32[1], index: 0, kind: input, shape index: {}]
  %s1 = inlined_call_operand.vmem [shape: f32[2,4,256], index: 1, kind: input, shape index: {}]
  %s2 = inlined_call_operand.vmem [shape: f32[2,1,256], index: 2, kind: input, shape index: {}]
  %s3 = inlined_call_operand.vmem [shape: f32[2,4,256], index: 3, kind: output, shape index: {}]
  %s4 = sld [smem:[#allocation0]]
  $region45: #{drop_forward.3} parent=0
    _
  %s6 = ssub.s32 1, %s4
  %s7 = scalar_select 0, %s6, %s4
  %8 = sst [smem:[#allocation2]] %s0
  loop: start=0, step=1, limit=4
  $region2: #{drop_forward.3} parent=0 // loop_pre_header
    _
  $region3: #{drop_forward.3} parent=0 // loop_header
    %s10 = sphi 0, %s14
    %p11 = scmp.ge.s32.totalorder %s10, 4
    %s17 = sphi 0, %s36
    %s18 = sphi 0, %s32
    %s19 = sphi 0, %s28
    %s20 = sphi 0, %s17
    %s21 = sphi 0, %s18
    %s22 = sphi 0, %s19
    %s23 = sphi 0, %s20
    %s24 = sphi 0, %s21
    %s25 = sphi 0, %s22
    %s37 = sphi 0, %s37
    %s39 = sphi 0, %s37
    %s40 = sphi 0, %s39
    %s54 = sphi 0, %s40
    %s64 = sphi 0, %s66
    %s67 = sphi 0, %s64
    %s68 = sphi 0, %s67
    %s84 = sphi 0, %s68
    %s92 = sphi 0, %s94
    %s95 = sphi 0, %s92
    %s96 = sphi 0, %s95
    %s112 = sphi 0, %s96
    %s122 = sphi 0, %s124
    %s125 = sphi 0, %s122
    %s126 = sphi 0, %s125
    %s142 = sphi 0, %s126
  $region4: #{drop_forward.3} parent=0 // loop_header_branch
    %13 = sbr.rel (%p11) target = $region8
  $region5: #{drop_forward.3} parent=0 // loop_body
    %s15 = ssub.s32 %s10, 1
    %s16 = ssub.s32 %s10, 2
    %s26 = sadd.s32 1, %s19
    %p27 = scmp.ge.s32.totalorder %s26, 1
    %s28 = scalar_select %p27, 0, %s26
    %s29 = sadd.s32 1, %s18
    %s30 = scalar_select %p27, %s29, %s18
    %p31 = scmp.ge.s32.totalorder %s30, 1
    %s32 = scalar_select %p31, 0, %s30
    %s33 = sadd.s32 1, %s17
    %s34 = scalar_select %p31, %s33, %s17
    %p35 = scmp.ge.s32.totalorder %s34, 2
    %s36 = scalar_select %p35, 0, %s34
    %s38 = sadd.s32 %s37, 1
    %p41 = scmp.eq.s32.totalorder %s10, 1
    %p42 = scmp.ne.s32.totalorder %s37, %s39
    %p43 = scmp.eq.s32.totalorder %s10, 0
    %p44 = por %p42, %p43
    %p45 = scmp.ne.s32.totalorder %s37, %s39
    %p46 = scmp.eq.s32.totalorder %s15, 1
    %p47 = por %p45, %p46
    %p48 = scmp.ne.s32.totalorder %s39, %s40
    %p49 = scmp.eq.s32.totalorder %s15, 0
    %p50 = por %p48, %p49
    %p51 = scmp.ne.s32.totalorder %s39, %s40
    %p52 = scmp.eq.s32.totalorder %s16, 1
    %p53 = por %p51, %p52
    %p55 = scmp.ne.s32.totalorder %s40, %s54
    %p56 = scmp.eq.s32.totalorder %s16, 0
    %p57 = por %p55, %p56
    %s58 = ssub.s32 %s17, %s36
    %s59 = ssub.s32 %s19, %s28
    %s60 = sor.u32 %s58, %s59
    %s61 = ssub.s32 %s18, %s32
    %s62 = sor.u32 %s60, %s61
    %p63 = scmp.eq.s32.totalorder %s62, 0
    %s65 = sadd.s32 %s64, 1
    %s66 = scalar_select %p63, %s64, %s65
    %p69 = pneg %p63
    %p70 = scmp.eq.s32.totalorder %s10, 1
    %p71 = por %p69, %p70
    %p72 = scmp.ne.s32.totalorder %s64, %s67
    %p73 = scmp.eq.s32.totalorder %s10, 0
    %p74 = por %p72, %p73
    %p75 = scmp.ne.s32.totalorder %s64, %s67
    %p76 = scmp.eq.s32.totalorder %s15, 1
    %p77 = por %p75, %p76
    %p78 = scmp.ne.s32.totalorder %s67, %s68
    %p79 = scmp.eq.s32.totalorder %s15, 0
    %p80 = por %p78, %p79
    %p81 = scmp.ne.s32.totalorder %s67, %s68
    %p82 = scmp.eq.s32.totalorder %s16, 1
    %p83 = por %p81, %p82
    %p85 = scmp.ne.s32.totalorder %s68, %s84
    %p86 = scmp.eq.s32.totalorder %s16, 0
    %p87 = por %p85, %p86
    %s88 = ssub.s32 %s17, %s36
    %s89 = ssub.s32 %s18, %s32
    %s90 = sor.u32 %s88, %s89
    %p91 = scmp.eq.s32.totalorder %s90, 0
    %s93 = sadd.s32 %s92, 1
    %s94 = scalar_select %p91, %s92, %s93
    %p97 = pneg %p91
    %p98 = scmp.eq.s32.totalorder %s10, 1
    %p99 = por %p97, %p98
    %p100 = scmp.ne.s32.totalorder %s92, %s95
    %p101 = scmp.eq.s32.totalorder %s10, 0
    %p102 = por %p100, %p101
    %p103 = scmp.ne.s32.totalorder %s92, %s95
    %p104 = scmp.eq.s32.totalorder %s15, 1
    %p105 = por %p103, %p104
    %p106 = scmp.ne.s32.totalorder %s95, %s96
    %p107 = scmp.eq.s32.totalorder %s15, 0
    %p108 = por %p106, %p107
    %p109 = scmp.ne.s32.totalorder %s95, %s96
    %p110 = scmp.eq.s32.totalorder %s16, 1
    %p111 = por %p109, %p110
    %p113 = scmp.ne.s32.totalorder %s96, %s112
    %p114 = scmp.eq.s32.totalorder %s16, 0
    %p115 = por %p113, %p114
    %s116 = ssub.s32 %s17, %s36
    %s117 = ssub.s32 %s19, %s28
    %s118 = sor.u32 %s116, %s117
    %s119 = ssub.s32 %s18, %s32
    %s120 = sor.u32 %s118, %s119
    %p121 = scmp.eq.s32.totalorder %s120, 0
    %s123 = sadd.s32 %s122, 1
    %s124 = scalar_select %p121, %s122, %s123
    %p127 = pneg %p121
    %p128 = scmp.eq.s32.totalorder %s10, 1
    %p129 = por %p127, %p128
    %p130 = scmp.ne.s32.totalorder %s122, %s125
    %p131 = scmp.eq.s32.totalorder %s10, 0
    %p132 = por %p130, %p131
    %p133 = scmp.ne.s32.totalorder %s122, %s125
    %p134 = scmp.eq.s32.totalorder %s15, 1
    %p135 = por %p133, %p134
    %p136 = scmp.ne.s32.totalorder %s125, %s126
    %p137 = scmp.eq.s32.totalorder %s15, 0
    %p138 = por %p136, %p137
    %p139 = scmp.ne.s32.totalorder %s125, %s126
    %p140 = scmp.eq.s32.totalorder %s16, 1
    %p141 = por %p139, %p140
    %p143 = scmp.ne.s32.totalorder %s126, %s142
    %p144 = scmp.eq.s32.totalorder %s16, 0
    %p145 = por %p143, %p144
    %p146 = scmp.le.s32.totalorder 1, %s10
    %p147 = scmp.lt.s32.totalorder %s10, 3
    %p148 = pnand %p146, %p147
    %p149 = pneg %p148
    // Predicated region
    $region9: #{drop_forward.3} parent=5 // pred_check
      _
    $region10: #{drop_forward.3} parent=5 // pred_check_branch
      %151 = sbr.rel (%p148) target = $region12
    $region11: #{drop_forward.3} parent=5 // pred_region
      %s152 = ssub.s32 %s10, 1
      // Predicated region
      $region13: #{drop_forward.3} parent=11 // pred_check
        %p153 = pneg %p50
      $region14: #{drop_forward.3} parent=11 // pred_check_branch
        %155 = sbr.rel (%p153) target = $region16
      $region15: #{drop_forward.3} parent=11 // pred_region
        _
      $region16: #{drop_forward.3} parent=11 // pred_fallthru
        _
    $region12: #{drop_forward.3} parent=5 // pred_fallthru
      _
    %p156 = scmp.lt.s32.totalorder %s10, 2
    // Predicated region
    $region17: #{drop_forward.3} parent=5 // pred_check
      %p157 = pneg %p156
    $region18: #{drop_forward.3} parent=5 // pred_check_branch
      %159 = sbr.rel (%p157) target = $region20
    $region19: #{drop_forward.3} parent=5 // pred_region
      // Predicated region
      $region21: #{drop_forward.3} parent=19 // pred_check
        %p160 = pneg %p74
      $region22: #{drop_forward.3} parent=19 // pred_check_branch
        %162 = sbr.rel (%p160) target = $region24
      $region23: #{drop_forward.3} parent=19 // pred_region
        %s163 = smul.u32 2, %s18
        %p164 = scmp.lt.s32.totalorder %s17, 1
        %s165 = scalar_select %p164, %s17, 1
        %p166 = scmp.lt.s32.totalorder %s19, 0
        %s167 = scalar_select %p166, %s19, 0
        %p168 = scmp.lt.s32.totalorder %s163, 1
        %s169 = scalar_select %p168, %s163, 1
        %s170 = smul.addr %s167, 2
        %s171 = sadd.s32 %s169, %s170
        %s172 = smul.addr %s165, 2
        %s173 = sadd.s32 %s171, %s172
        %s174 = smul.addr %s173, 4
        %s175 = scalar_lea.vmem %s1, %s174
        %s176 = smul.u32 2, %s18
      $region24: #{drop_forward.3} parent=19 // pred_fallthru
        _
      // Predicated region
      $region25: #{drop_forward.3} parent=19 // pred_check
        %p177 = pneg %p102
      $region26: #{drop_forward.3} parent=19 // pred_check_branch
        %179 = sbr.rel (%p177) target = $region28
      $region27: #{drop_forward.3} parent=19 // pred_region
        %s180 = smul.u32 2, %s18
        %p181 = scmp.lt.s32.totalorder %s17, 1
        %s182 = scalar_select %p181, %s17, 1
        %p183 = scmp.lt.s32.totalorder %s180, 1
        %s184 = scalar_select %p183, %s180, 1
        %s185 = smul.addr %s182, 2
        %s186 = sadd.s32 %s184, %s185
        %s187 = scalar_lea.vmem %s2, %s186
        %s188 = smul.u32 2, %s18
      $region28: #{drop_forward.3} parent=19 // pred_fallthru
        _
    $region20: #{drop_forward.3} parent=5 // pred_fallthru
      _
    %p189 = scmp.le.s32.totalorder 1, %s10
    %p190 = scmp.lt.s32.totalorder %s10, 3
    %p191 = pnand %p189, %p190
    %p192 = pneg %p191
    // Predicated region
    $region29: #{drop_forward.3} parent=5 // pred_check
      _
    $region30: #{drop_forward.3} parent=5 // pred_check_branch
      %194 = sbr.rel (%p191) target = $region32
    $region31: #{drop_forward.3} parent=5 // pred_region
      %s195 = ssub.s32 %s10, 1
      %p196 = pneg %p50
      %p197 = pneg %p47
      %s198 = smul.u32 2, %s21
      %p199 = scmp.lt.s32.totalorder %s20, 1
      %s200 = scalar_select %p199, %s20, 1
      %p201 = scmp.lt.s32.totalorder %s22, 0
      %s202 = scalar_select %p201, %s22, 0
      %p203 = scmp.lt.s32.totalorder %s198, 1
      %s204 = scalar_select %p203, %s198, 1
      %s205 = smul.addr %s202, 2
      %s206 = sadd.s32 %s204, %s205
      %s207 = smul.addr %s200, 2
      %s208 = sadd.s32 %s206, %s207
      %s209 = smul.addr %s208, 4
      %s210 = scalar_lea.vmem %s1, %s209
      %p211 = pneg %p80
      %p212 = pneg %p77
      %s213 = smul.u32 2, %s21
      %p214 = scmp.lt.s32.totalorder %s20, 1
      %s215 = scalar_select %p214, %s20, 1
      %p216 = scmp.lt.s32.totalorder %s213, 1
      %s217 = scalar_select %p216, %s213, 1
      %s218 = smul.addr %s215, 2
      %s219 = sadd.s32 %s217, %s218
      %s220 = scalar_lea.vmem %s2, %s219
      %p221 = pneg %p108
      %p222 = pneg %p105
      %p223 = pneg %p138
      %p224 = pneg %p135
      %s225 = smul.u32 2, %s21
      %p226 = scmp.lt.s32.totalorder %s20, 1
      %s227 = scalar_select %p226, %s20, 1
      %p228 = scmp.lt.s32.totalorder %s22, 0
      %s229 = scalar_select %p228, %s22, 0
      %p230 = scmp.lt.s32.totalorder %s225, 1
      %s231 = scalar_select %p230, %s225, 1
      %s232 = smul.addr %s229, 2
      %s233 = sadd.s32 %s231, %s232
      %s234 = smul.addr %s227, 2
      %s235 = sadd.s32 %s233, %s234
      %s236 = smul.addr %s235, 4
      %s237 = scalar_lea.vmem %s3, %s236
      %s238 = smul.u32 2, %s21
      %p239 = scmp.lt.s32.totalorder %s20, 1
      %s240 = scalar_select %p239, %s20, 1
      %p241 = scmp.lt.s32.totalorder %s22, 0
      %s242 = scalar_select %p241, %s22, 0
      %p243 = scmp.lt.s32.totalorder %s238, 1
      %s244 = scalar_select %p243, %s238, 1
      %s245 = smul.addr %s242, 2
      %s246 = sadd.s32 %s244, %s245
      %s247 = smul.addr %s240, 2
      %s248 = sadd.s32 %s246, %s247
      %s249 = smul.addr %s248, 4
      %s250 = scalar_lea.vmem %s1, %s249
      %s251 = smul.u32 2, %s21
      %s252 = smul.u32 2, %s21
      %p253 = scmp.lt.s32.totalorder %s20, 1
      %s254 = scalar_select %p253, %s20, 1
      %p255 = scmp.lt.s32.totalorder %s252, 1
      %s256 = scalar_select %p255, %s252, 1
      %s257 = smul.addr %s254, 2
      %s258 = sadd.s32 %s256, %s257
      %s259 = scalar_lea.vmem %s2, %s258
      %s260 = smul.u32 2, %s21
      %s261 = smul.u32 2, %s21
      %p262 = scmp.lt.s32.totalorder %s20, 1
      %s263 = scalar_select %p262, %s20, 1
      %p264 = scmp.lt.s32.totalorder %s22, 0
      %s265 = scalar_select %p264, %s22, 0
      %p266 = scmp.lt.s32.totalorder %s261, 1
      %s267 = scalar_select %p266, %s261, 1
      %s268 = smul.addr %s265, 2
      %s269 = sadd.s32 %s267, %s268
      %s270 = smul.addr %s263, 2
      %s271 = sadd.s32 %s269, %s270
      %s272 = smul.addr %s271, 4
      %s273 = scalar_lea.vmem %s3, %s272
      %s274 = smul.u32 2, %s21
      %s275 = sld [smem:[#allocation2]]
      %v276 = vld [vmem:[%s250] sm:$0xff]
      %v277 = vld [vmem:[%s259] sm:$0x3]
      %v279 = vperm.slane %v277, 0
      %v280 = vperm.slane %v277, 1
      %v281 = vrot.slane %v280, 4
      %vm282 = vcmask 1043456
      %v283 = vsel %vm282, %v279, %v281
      %v285 = vmul.f32 %v276, %v283
      %v286 = vstv %s275
      %v287 = vmul.f32 %v285, %v286
      %288 = vst [vmem:[%s273] sm:$0xff] %v287
      %s289 = smul.u32 2, %s21
      %p290 = scmp.lt.s32.totalorder %s20, 1
      %s291 = scalar_select %p290, %s20, 1
      %p292 = scmp.lt.s32.totalorder %s22, 0
      %s293 = scalar_select %p292, %s22, 0
      %p294 = scmp.lt.s32.totalorder %s289, 1
      %s295 = scalar_select %p294, %s289, 1
      %s296 = smul.addr %s293, 2
      %s297 = sadd.s32 %s295, %s296
      %s298 = smul.addr %s291, 2
      %s299 = sadd.s32 %s297, %s298
      %s300 = smul.addr %s299, 4
      %s301 = scalar_lea.vmem %s3, %s300
      // Predicated region
      $region33: #{drop_forward.3} parent=31 // pred_check
        %p302 = pneg %p135
      $region34: #{drop_forward.3} parent=31 // pred_check_branch
        %304 = sbr.rel (%p302) target = $region36
      $region35: #{drop_forward.3} parent=31 // pred_region
        %s305 = smul.u32 2, %s21
      $region36: #{drop_forward.3} parent=31 // pred_fallthru
        _
    $region32: #{drop_forward.3} parent=5 // pred_fallthru
      _
    %p306 = scmp.le.s32.totalorder 2, %s10
    // Predicated region
    $region37: #{drop_forward.3} parent=5 // pred_check
      %p307 = pneg %p306
    $region38: #{drop_forward.3} parent=5 // pred_check_branch
      %309 = sbr.rel (%p307) target = $region40
    $region39: #{drop_forward.3} parent=5 // pred_region
      %s310 = ssub.s32 %s10, 2
      // Predicated region
      $region41: #{drop_forward.3} parent=39 // pred_check
        %p311 = pneg %p141
      $region42: #{drop_forward.3} parent=39 // pred_check_branch
        %313 = sbr.rel (%p311) target = $region44
      $region43: #{drop_forward.3} parent=39 // pred_region
        %s314 = smul.u32 2, %s24
        %p315 = scmp.lt.s32.totalorder %s23, 1
        %s316 = scalar_select %p315, %s23, 1
        %p317 = scmp.lt.s32.totalorder %s25, 0
        %s318 = scalar_select %p317, %s25, 0
        %p319 = scmp.lt.s32.totalorder %s314, 1
        %s320 = scalar_select %p319, %s314, 1
        %s321 = smul.addr %s318, 2
        %s322 = sadd.s32 %s320, %s321
        %s323 = smul.addr %s316, 2
        %s324 = sadd.s32 %s322, %s323
        %s325 = smul.addr %s324, 4
        %s326 = scalar_lea.vmem %s3, %s325
      $region44: #{drop_forward.3} parent=39 // pred_fallthru
        _
    $region40: #{drop_forward.3} parent=5 // pred_fallthru
      _
  $region6: #{drop_forward.3} parent=0 // loop_footer
    %s14 = sadd.s32 1, %s10
  $region7: #{drop_forward.3} parent=0 // loop_footer_branch
    %9 = sbr.rel target = $region3
  $region8: #{drop_forward.3} parent=0 // loop_exit
    _

// kernel: drop_forward.2
$region0: #{drop_forward.2}
  #allocation0 [shape = 'u32[]', space=smem, size = 0x4, offset = 0x4, fixed_abs, tag = 'smem constant byte address 0x4 - core index']
  #allocation1 [shape = 'u32[72,128]{1,0:T(1,128)}', space=vmem, size = 0x9000, scoped, tag = 'internal scratch']
  %s0 = inlined_call_operand.vmem [shape: f32[2,1,256], index: 0, kind: input, shape index: {}]
  %s1 = inlined_call_operand.vmem [shape: f32[2,1,256], index: 1, kind: output, shape index: {0}]
  %s2 = inlined_call_operand.vmem [shape: f32[2], index: 2, kind: output, shape index: {1}]
  %3 = xla_tuple %s1, %s2
  %s4 = sld [smem:[#allocation0]]
  $region45: #{drop_forward.2} parent=0
    _
  %s6 = ssub.s32 1, %s4
  %s7 = scalar_select 0, %s6, %s4
  $region1: #{drop_forward.2} parent=0
    #allocation2 [shape = 'u8[512]{0}', space=smem, size = 0x200, scoped, tag = 'output window, operand 1, single buffered']
    #allocation3 [shape = 's32[2]{0}', space=sflag, size = 0x8, scoped, tag = 'scoped memory for drop_forward.2']
    %8 = vsyncpa [#allocation3], 0
    loop: start=0, step=1, limit=4
    $region2: #{drop_forward.2} parent=1 // loop_pre_header
      _
    $region3: #{drop_forward.2} parent=1 // loop_header
      %s10 = sphi 0, %s14
      %p11 = scmp.ge.s32.totalorder %s10, 4
      %s20 = sphi 0, %s22
      %s23 = sphi 0, %s20
      %s24 = sphi 0, %s23
      %s40 = sphi 0, %s24
      %s46 = sphi 0, %s48
      %s49 = sphi 0, %s46
      %s50 = sphi 0, %s49
      %s66 = sphi 0, %s50
      %s70 = sphi 0, %s70
      %s72 = sphi 0, %s70
      %s73 = sphi 0, %s72
      %s87 = sphi 0, %s73
    $region4: #{drop_forward.2} parent=1 // loop_header_branch
      %13 = sbr.rel (%p11) target = $region8
    $region5: #{drop_forward.2} parent=1 // loop_body
      %s15 = ssub.s32 %s10, 1
      %s16 = ssub.s32 %s10, 2
      %s17 = sadd.s32 %s10, 1
      %s18 = ssub.s32 %s10, %s17
      %p19 = scmp.eq.s32.totalorder %s18, 0
      %s21 = sadd.s32 %s20, 1
      %s22 = scalar_select %p19, %s20, %s21
      %p25 = pneg %p19
      %p26 = scmp.eq.s32.totalorder %s10, 1
      %p27 = por %p25, %p26
      %p28 = scmp.ne.s32.totalorder %s20, %s23
      %p29 = scmp.eq.s32.totalorder %s10, 0
      %p30 = por %p28, %p29
      %p31 = scmp.ne.s32.totalorder %s20, %s23
      %p32 = scmp.eq.s32.totalorder %s15, 1
      %p33 = por %p31, %p32
      %p34 = scmp.ne.s32.totalorder %s23, %s24
      %p35 = scmp.eq.s32.totalorder %s15, 0
      %p36 = por %p34, %p35
      %p37 = scmp.ne.s32.totalorder %s23, %s24
      %p38 = scmp.eq.s32.totalorder %s16, 1
      %p39 = por %p37, %p38
      %p41 = scmp.ne.s32.totalorder %s24, %s40
      %p42 = scmp.eq.s32.totalorder %s16, 0
      %p43 = por %p41, %p42
      %s44 = ssub.s32 %s10, %s17
      %p45 = scmp.eq.s32.totalorder %s44, 0
      %s47 = sadd.s32 %s46, 1
      %s48 = scalar_select %p45, %s46, %s47
      %p51 = pneg %p45
      %p52 = scmp.eq.s32.totalorder %s10, 1
      %p53 = por %p51, %p52
      %p54 = scmp.ne.s32.totalorder %s46, %s49
      %p55 = scmp.eq.s32.totalorder %s10, 0
      %p56 = por %p54, %p55
      %p57 = scmp.ne.s32.totalorder %s46, %s49
      %p58 = scmp.eq.s32.totalorder %s15, 1
      %p59 = por %p57, %p58
      %p60 = scmp.ne.s32.totalorder %s49, %s50
      %p61 = scmp.eq.s32.totalorder %s15, 0
      %p62 = por %p60, %p61
      %p63 = scmp.ne.s32.totalorder %s49, %s50
      %p64 = scmp.eq.s32.totalorder %s16, 1
      %p65 = por %p63, %p64
      %p67 = scmp.ne.s32.totalorder %s50, %s66
      %p68 = scmp.eq.s32.totalorder %s16, 0
      %p69 = por %p67, %p68
      %s71 = sadd.s32 %s70, 1
      %p74 = scmp.eq.s32.totalorder %s10, 1
      %p75 = scmp.ne.s32.totalorder %s70, %s72
      %p76 = scmp.eq.s32.totalorder %s10, 0
      %p77 = por %p75, %p76
      %p78 = scmp.ne.s32.totalorder %s70, %s72
      %p79 = scmp.eq.s32.totalorder %s15, 1
      %p80 = por %p78, %p79
      %p81 = scmp.ne.s32.totalorder %s72, %s73
      %p82 = scmp.eq.s32.totalorder %s15, 0
      %p83 = por %p81, %p82
      %p84 = scmp.ne.s32.totalorder %s72, %s73
      %p85 = scmp.eq.s32.totalorder %s16, 1
      %p86 = por %p84, %p85
      %p88 = scmp.ne.s32.totalorder %s73, %s87
      %p89 = scmp.eq.s32.totalorder %s16, 0
      %p90 = por %p88, %p89
      %p91 = scmp.le.s32.totalorder 1, %s10
      %p92 = scmp.lt.s32.totalorder %s10, 3
      %p93 = pnand %p91, %p92
      %p94 = pneg %p93
      // Predicated region
      $region9: #{drop_forward.2} parent=5 // pred_check
        _
      $region10: #{drop_forward.2} parent=5 // pred_check_branch
        %96 = sbr.rel (%p93) target = $region12
      $region11: #{drop_forward.2} parent=5 // pred_region
        %s97 = ssub.s32 %s10, 1
      $region12: #{drop_forward.2} parent=5 // pred_fallthru
        _
      %p98 = scmp.lt.s32.totalorder %s10, 2
      // Predicated region
      $region13: #{drop_forward.2} parent=5 // pred_check
        %p99 = pneg %p98
      $region14: #{drop_forward.2} parent=5 // pred_check_branch
        %101 = sbr.rel (%p99) target = $region16
      $region15: #{drop_forward.2} parent=5 // pred_region
        // Predicated region
        $region17: #{drop_forward.2} parent=15 // pred_check
          %p102 = pneg %p30
        $region18: #{drop_forward.2} parent=15 // pred_check_branch
          %104 = sbr.rel (%p102) target = $region20
        $region19: #{drop_forward.2} parent=15 // pred_region
          %p105 = scmp.lt.s32.totalorder %s10, 1
          %s106 = scalar_select %p105, %s10, 1
          %s107 = smul.addr %s106, 2
          %s108 = scalar_lea.vmem %s0, %s107
        $region20: #{drop_forward.2} parent=15 // pred_fallthru
          _
      $region16: #{drop_forward.2} parent=5 // pred_fallthru
        _
      %p109 = scmp.le.s32.totalorder 1, %s10
      %p110 = scmp.lt.s32.totalorder %s10, 3
      %p111 = pnand %p109, %p110
      %p112 = pneg %p111
      // Predicated region
      $region21: #{drop_forward.2} parent=5 // pred_check
        _
      $region22: #{drop_forward.2} parent=5 // pred_check_branch
        %114 = sbr.rel (%p111) target = $region24
      $region23: #{drop_forward.2} parent=5 // pred_region
        %s115 = ssub.s32 %s10, 1
        %p116 = scmp.lt.s32.totalorder %s15, 1
        %s117 = scalar_select %p116, %s15, 1
        %s118 = smul.addr %s117, 2
        %s119 = scalar_lea.vmem %s0, %s118
        %p120 = pneg %p36
        %p121 = pneg %p33
        %p122 = pneg %p62
        %p123 = pneg %p59
        %p124 = scmp.lt.s32.totalorder %s15, 1
        %s125 = scalar_select %p124, %s15, 1
        %s126 = smul.addr %s125, 2
        %s127 = scalar_lea.vmem %s1, %s126
        %p128 = pneg %p83
        %p129 = pneg %p80
        %p130 = scmp.lt.s32.totalorder %s15, 1
        %s131 = scalar_select %p130, %s15, 1
        %s132 = smul.addr %s131, 2
        %s133 = scalar_lea.vmem %s0, %s132
        %p134 = scmp.lt.s32.totalorder %s15, 1
        %s135 = scalar_select %p134, %s15, 1
        %s136 = smul.addr %s135, 2
        %s137 = scalar_lea.vmem %s1, %s136
        %v138 = vld [vmem:[%s133] sm:$0x3]
        %vm139 = vcmp.lt.f32.partialorder %v138, 0.025
        %v140 = vsel %vm139, 1.0, 0.0
        %v141 = vlaneseq
        %v142 = vand.u32 %v141, 127
        %v143 = vadd.s32 %v142, 128
        %vm144 = vcmp.lt.s32.totalorder %v142, 0
        %v145 = vsub.s32 0, %v142
        %v146 = vsel %vm144, %v145, %v142
        %v147 = vshrl.u32 %v146, 4
        %v148 = vand.u32 %v146, 15
        %v149 = vsub.s32 0, %v148
        %v150 = vsel %vm144, %v149, %v148
        %vm151 = vcmp.lt.s32.totalorder %v143, 0
        %v152 = vsub.s32 0, %v143
        %v153 = vsel %vm151, %v152, %v143
        %v154 = vshrl.u32 %v153, 4
        %v155 = vand.u32 %v153, 15
        %v156 = vsub.s32 0, %v155
        %v157 = vsel %vm151, %v156, %v155
        %vm158 = vcmp.ne.s32.totalorder %v150, 0
        %vm159 = vcmp.ne.s32.totalorder %v157, 0
        %vm160 = vcmp.lt.s32.totalorder %v150, 0
        %vm161 = vcmp.lt.s32.totalorder %v157, 0
        %vm162 = vmand %vm160, %vm158
        %vm163 = vmand %vm161, %vm159
        %v164 = vadd.s32 %v150, 16
        %v165 = vadd.s32 %v157, 16
        %v166 = vsel %vm162, %v164, %v150
        %v167 = vsel %vm163, %v165, %v157
        %v169 = vperm.slane %v140, 0
        %v170 = vperm.slane %v140, 1
        %173 = vrot.lane.b32.xlu0 %v169, 16
        %v174 = vpop.permute.xlu0 %173
        %175 = vrot.lane.b32.xlu0 %v170, 16
        %v176 = vpop.permute.xlu0 %175
        %vm177 = vcmp.lt.s32.totalorder %v142, 16
        %v178 = vsel %vm177, %v174, %v176
        %v179 = vsel %vm177, %v176, %v174
        %v180 = vadd.s32 %v142, 4294967280
        %v181 = vadd.s32 %v143, 4294967280
        %vm182 = vcmp.ge.s32.totalorder %v180, 0
        %vm183 = vcmp.ge.s32.totalorder %v181, 0
        %vm184 = vcmp.lt.s32.totalorder %v180, 256
        %vm185 = vcmp.lt.s32.totalorder %v181, 256
        %vm186 = vmand %vm182, %vm184
        %vm187 = vmand %vm183, %vm185
        %v188 = vsel %vm186, %v179, 0.0
        %v189 = vsel %vm187, %v178, 0.0
        %v192 = vrot.slane %v189, 7
        %vm193 = vcmask 1040384
        %v194 = vsel %vm193, %v188, %v192
        %v196 = vmax.f32 %v140, %v194
        %v198 = vperm.slane %v196, 0
        %v199 = vperm.slane %v196, 1
        %202 = vrot.lane.b32.xlu0 %v198, 1
        %v203 = vpop.permute.xlu0 %202
        %204 = vrot.lane.b32.xlu0 %v199, 1
        %v205 = vpop.permute.xlu0 %204
        %vm206 = vcmp.lt.s32.totalorder %v142, 1
        %v207 = vsel %vm206, %v203, %v205
        %v208 = vsel %vm206, %v205, %v203
        %v209 = vadd.s32 %v166, 4294967295
        %v210 = vadd.s32 %v167, 4294967295
        %vm211 = vcmp.ge.s32.totalorder %v209, 0
        %vm212 = vcmp.ge.s32.totalorder %v210, 0
        %vm213 = vcmp.lt.s32.totalorder %v209, 16
        %vm214 = vcmp.lt.s32.totalorder %v210, 16
        %vm215 = vmand %vm211, %vm213
        %vm216 = vmand %vm212, %vm214
        %v217 = vsel %vm215, %v208, 0.0
        %v218 = vsel %vm216, %v207, 0.0
        %v221 = vrot.slane %v218, 7
        %v222 = vsel %vm193, %v217, %v221
        %v224 = vmax.f32 %v196, %v222
        %v225 = vsub.f32 1.0, %v224
        %v227 = vperm.slane %v225, 0
        %v228 = vperm.slane %v225, 1
        %v231 = vsel %vm193, %v227, 0.0
        %v232 = vsel %vm193, %v228, 0.0
        %v233 = vadd.f32 %v231, %v232
        %234 = vadd.xlane.f32.xlu0 %v233
        %v235 = vpop.xlane.xlu0 %234
        %v236 = vrot.slane %v235, 4
        %v237 = vadd.f32 %v235, %v236
        %v238 = vrot.slane %v237, 2
        %v239 = vadd.f32 %v237, %v238
        %v240 = vrot.slane %v239, 1
        %v241 = vadd.f32 %v239, %v240
        %s242 = vtos %v241
        %s243 = scalar_lea.smem [#allocation2], %s15
        %244 = sst [smem:[%s243]] %s242
        %v245 = vlaneseq
        %vm246 = vcmp.ge.s32.totalorder %v245, 0
        %vm247 = vcmp.lt.s32.totalorder %v245, 256
        %vm248 = vmand %vm246, %vm247
        %249 = vst.msk [vmem:[%s137] sm:$0x3] %vm248, %v225
        %p250 = scmp.lt.s32.totalorder %s15, 1
        %s251 = scalar_select %p250, %s15, 1
        %s252 = smul.addr %s251, 2
        %s253 = scalar_lea.vmem %s1, %s252
        // Predicated region
        $region25: #{drop_forward.2} parent=23 // pred_check
          %p254 = pneg %p59
        $region26: #{drop_forward.2} parent=23 // pred_check_branch
          %256 = sbr.rel (%p254) target = $region28
        $region27: #{drop_forward.2} parent=23 // pred_region
          _
        $region28: #{drop_forward.2} parent=23 // pred_fallthru
          _
        // Predicated region
        $region29: #{drop_forward.2} parent=23 // pred_check
          %p257 = pneg %p80
        $region30: #{drop_forward.2} parent=23 // pred_check_branch
          %259 = sbr.rel (%p257) target = $region32
        $region31: #{drop_forward.2} parent=23 // pred_region
          %261 = vsyncadd [#allocation3], 0
          %s263 = sshll.u32 %s2, 4
          %s264 = int_to_ptr.vmem [resolvable:$true] %s263
          %266 = dma.smem_to_vmem [#allocation2], 16, %s264, [#allocation3]
        $region32: #{drop_forward.2} parent=23 // pred_fallthru
          _
        // Predicated region
        $region33: #{drop_forward.2} parent=23 // pred_check
          %p267 = pneg %p80
        $region34: #{drop_forward.2} parent=23 // pred_check_branch
          %269 = sbr.rel (%p267) target = $region36
        $region35: #{drop_forward.2} parent=23 // pred_region
          %271 = dma.done [#allocation3], 16
        $region36: #{drop_forward.2} parent=23 // pred_fallthru
          _
        %272 = sfence
      $region24: #{drop_forward.2} parent=5 // pred_fallthru
        _
      %p273 = scmp.le.s32.totalorder 2, %s10
      // Predicated region
      $region37: #{drop_forward.2} parent=5 // pred_check
        %p274 = pneg %p273
      $region38: #{drop_forward.2} parent=5 // pred_check_branch
        %276 = sbr.rel (%p274) target = $region40
      $region39: #{drop_forward.2} parent=5 // pred_region
        %s277 = ssub.s32 %s10, 2
        // Predicated region
        $region41: #{drop_forward.2} parent=39 // pred_check
          %p278 = pneg %p65
        $region42: #{drop_forward.2} parent=39 // pred_check_branch
          %280 = sbr.rel (%p278) target = $region44
        $region43: #{drop_forward.2} parent=39 // pred_region
          %p281 = scmp.lt.s32.totalorder %s16, 1
          %s282 = scalar_select %p281, %s16, 1
          %s283 = smul.addr %s282, 2
          %s284 = scalar_lea.vmem %s1, %s283
        $region44: #{drop_forward.2} parent=39 // pred_fallthru
          _
      $region40: #{drop_forward.2} parent=5 // pred_fallthru
        _
    $region6: #{drop_forward.2} parent=1 // loop_footer
      %s14 = sadd.s32 1, %s10
    $region7: #{drop_forward.2} parent=1 // loop_footer_branch
      %9 = sbr.rel target = $region3
    $region8: #{drop_forward.2} parent=1 // loop_exit
      _
    %285 = vsyncpa [#allocation3], 1
    %s286 = scalar_lea.sflag [#allocation3], 1
    %287 = vsyncpa %s286, 1

</llo_original>
